<compile_context>
chip_gen: v7x
topology: tpu7x:2x2x1
jax: 0.10.0
libtpu: 0.0.40
codegen_flags: <defaults>
</compile_context>

<pallas_src>
import functools

import jax
import jax.numpy as jnp
from jax.experimental import pallas as pl
from jax.experimental.pallas import tpu as pltpu


def _make_loss_kernel(lmd: float, n_total: int, tn: int, slab: int,
                      k_extent: int, has_pad: bool):
    inv_n = 1.0 / float(n_total)
    lmd = float(lmd)
    n_slabs = tn // slab

    def loss_kernel(x_ref, t_ref, o_ref, kl_acc, ce_acc):
        p = pl.program_id(0)
        k = pl.program_id(1)

        @pl.when(k == 0)
        def _init():
            kl_acc[...] = jnp.zeros_like(kl_acc)
            ce_acc[...] = jnp.zeros_like(ce_acc)

        # Global row offset of this DMA tile, from the UNclamped linear tile
        # index (overhung / clamped tiles are fully removed by the row mask).
        tile_row0 = (p * k_extent + k) * tn

        if has_pad:
            row_iota = jax.lax.broadcasted_iota(jnp.int32, (slab, 1), 0)

        def slab_body(s, carry):
            r0 = s * slab
            # Inputs travel over HBM in their native dtype; upcast per slab so
            # f32 temporaries stay slab-sized, not tile-sized.
            x = x_ref[pl.ds(r0, slab), :].astype(jnp.float32)   # (slab, C) log-probs
            t = t_ref[pl.ds(r0, slab), :].astype(jnp.float32)   # (slab, C) target probs
            c = x.shape[1]

            # ---- KLDivLoss pointwise: xlogy(t, t) - t*x (0 where t == 0) ----
            # (t == 0 with x == -inf still yields NaN, matching PyTorch.)
            safe_t = jnp.where(t > 0, t, 1.0)
            kl_pt = jnp.where(t > 0, t * jnp.log(safe_t), 0.0) - t * x
            kl_row = jnp.sum(kl_pt, axis=1, keepdims=True)              # (slab, 1)

            # ---- CrossEntropy with labels = argmax(t, axis=1) ---------------
            row_max = jnp.max(x, axis=1, keepdims=True)
            lse = row_max + jnp.log(
                jnp.sum(jnp.exp(x - row_max), axis=1, keepdims=True))
            # First-index tie-break, matching torch.argmax exactly.
            col_ids = jax.lax.broadcasted_iota(jnp.int32, x.shape, 1)
            t_max = jnp.max(t, axis=1, keepdims=True)
            labels = jnp.min(jnp.where(t == t_max, col_ids, c),
                             axis=1, keepdims=True)                     # (slab, 1)
            picked = jnp.sum(jnp.where(col_ids == labels, x, 0.0),
                             axis=1, keepdims=True)                     # (slab, 1)
            ce_row = lse - picked

            if has_pad:
                # jnp.where is a true select: garbage rows from partial or
                # clamped tiles never reach the accumulators.
                valid = (tile_row0 + r0 + row_iota) < n_total
                kl_row = jnp.where(valid, kl_row, 0.0)
                ce_row = jnp.where(valid, ce_row, 0.0)

            kl_acc[...] = kl_acc[...] + kl_row
            ce_acc[...] = ce_acc[...] + ce_row
            return carry

        jax.lax.fori_loop(0, n_slabs, slab_body, 0, unroll=(n_slabs <= 8))

        # Cross-sublane reduce, lmd mix, 1/N scale and the single masked (1,1)
        # store happen only once per super-block.
        @pl.when(k == pl.num_programs(1) - 1)
        def _finalize():
            kl_tot = jnp.sum(kl_acc[...], axis=0, keepdims=True)        # (1, 1)
            ce_tot = jnp.sum(ce_acc[...], axis=0, keepdims=True)        # (1, 1)
            o_ref[...] = (lmd * kl_tot + (1.0 - lmd) * ce_tot) * inv_n

    return loss_kernel


def _pick_tiles(n: int, c: int, itemsize: int,
                tile_rows=None, slab_rows=None):
    """Returns (tn, slab): DMA-tile rows and in-kernel compute-slab rows."""
    align = max(8, 32 // itemsize)                        # sublane packing per dtype
    # Compute slab: keep ~8-10 live f32 (slab, C) temporaries around ~4 MiB total.
    slab = slab_rows if slab_rows is not None else max(
        align, min(1024, (512 * 1024) // (4 * c)))
    slab = max(align, (slab // align) * align)
    if n <= slab:
        return n, n                                       # single full-extent tile
    # DMA tile: ~4 MiB per input buffer (native dtype), a multiple of `slab`,
    # never larger than the array.
    if tile_rows is None:
        tn = (4 * 1024 * 1024) // (c * itemsize)
        tn = min(tn, 16 * slab)
    else:
        tn = tile_rows
    tn = max(slab, (tn // slab) * slab)
    tn = min(tn, (n // slab) * slab)
    return tn, slab


def _vmem_limit_bytes(needed: int) -> int:
    """Raise v5e's 16 MiB scoped default, stay under per-chip physical VMEM."""
    try:
        physical = int(pltpu.get_tpu_info().vmem_capacity_bytes)
    except Exception:
        physical = 64 * 1024 * 1024                       # v7x floor (smallest VMEM)
    cap = (physical * 3) // 4                             # headroom for Mosaic internals
    return int(max(min(needed + (8 << 20), cap), min(32 << 20, cap)))


@functools.partial(jax.jit, static_argnames=("lmd", "tile_rows", "slab_rows"))
def weighted_combination_loss(x, t, lmd: float = 0.8,
                              tile_rows=None, slab_rows=None):
    """x: (N, C) log-probabilities; t: (N, C) probabilities. Returns f32 scalar."""
    assert x.shape == t.shape and x.ndim == 2
    n, c = x.shape
    isx = jnp.dtype(x.dtype).itemsize
    ist = jnp.dtype(t.dtype).itemsize
    tn, slab = _pick_tiles(n, c, max(isx, ist), tile_rows, slab_rows)

    num_tiles = pl.cdiv(n, tn)
    p_blocks = 2 if num_tiles >= 2 else 1                 # v7x: one super-block per TC
    k_extent = pl.cdiv(num_tiles, p_blocks)
    has_pad = (p_blocks * k_extent * tn) != n
    last_tile = num_tiles - 1

    def in_index_map(pb, kb):
        # Clamp so an overhung (fully masked) tile re-reads in-bounds data
        # instead of issuing an out-of-bounds DMA.
        return (jnp.minimum(pb * k_extent + kb, last_tile), 0)

    needed = (2 * tn * c * (isx + ist)                    # double-buffered input tiles
              + 10 * slab * c * 4                         # in-kernel f32 temporaries
              + 2 * slab * 4 + (1 << 20))                 # accumulators + slack

    out = pl.pallas_call(
        _make_loss_kernel(float(lmd), n, tn, slab, k_extent, has_pad),
        out_shape=jax.ShapeDtypeStruct((p_blocks, 1), jnp.float32),
        grid_spec=pltpu.PrefetchScalarGridSpec(
            num_scalar_prefetch=0,
            grid=(p_blocks, k_extent),
            in_specs=[
                pl.BlockSpec((tn, c), in_index_map),
                pl.BlockSpec((tn, c), in_index_map),
            ],
            out_specs=pl.BlockSpec((1, 1), lambda pb, kb: (pb, 0)),
            scratch_shapes=[
                pltpu.VMEM((slab, 1), jnp.float32),       # per-row KL partials
                pltpu.VMEM((slab, 1), jnp.float32),       # per-row CE partials
            ],
        ),
        compiler_params=pltpu.CompilerParams(
            dimension_semantics=("parallel", "arbitrary"),
            vmem_limit_bytes=_vmem_limit_bytes(needed),
        ),
        cost_estimate=pl.CostEstimate(
            flops=int(22 * n * c),
            transcendentals=int(2 * n * c),
            bytes_accessed=int(n * c * (isx + ist) + 4 * p_blocks),
        ),
    )(x, t)
    # Tiny P-way sum (P <= 2) of per-super-block partial losses.
    return jnp.sum(out)


def _reference(x, t, lmd=0.8):
    # Pure-JAX reference mirroring the PyTorch module (f32 math).
    x = x.astype(jnp.float32)
    t = t.astype(jnp.float32)
    n = x.shape[0]
    safe_t = jnp.where(t > 0, t, 1.0)
    kl = jnp.sum(jnp.where(t > 0, t * jnp.log(safe_t), 0.0) - t * x) / n
    labels = jnp.argmax(t, axis=1)
    lse = jax.scipy.special.logsumexp(x, axis=1)
    ce = jnp.mean(lse - jnp.take_along_axis(x, labels[:, None], axis=1)[:, 0])
    return lmd * kl + (1.0 - lmd) * ce


if __name__ == "__main__":
    key = jax.random.PRNGKey(0)
    k1, k2, k3, k4, k5, k6, k7, k8 = jax.random.split(key, 8)

    # --- Test 1: tiny f32 inputs, single full-extent tile ----------------------
    N, C = 8, 32
    x = jax.nn.log_softmax(jax.random.normal(k1, (N, C), dtype=jnp.float32), axis=1)
    t = jax.nn.softmax(jax.random.normal(k2, (N, C), dtype=jnp.float32), axis=1)
    loss = jax.block_until_ready(weighted_combination_loss(x, t, lmd=0.8))
    ref = _reference(x, t, lmd=0.8)
    assert jnp.allclose(loss, ref, rtol=1e-5, atol=1e-5), (loss, ref)

    # --- Test 2: bf16 inputs, single tile --------------------------------------
    N2, C2 = 70, 160
    x2 = jax.nn.log_softmax(
        jax.random.normal(k3, (N2, C2), dtype=jnp.float32), axis=1).astype(jnp.bfloat16)
    t2 = jax.nn.softmax(
        jax.random.normal(k4, (N2, C2), dtype=jnp.float32), axis=1).astype(jnp.bfloat16)
    loss2 = jax.block_until_ready(weighted_combination_loss(x2, t2, lmd=0.8))
    ref2 = _reference(x2, t2, lmd=0.8)
    assert jnp.allclose(loss2, ref2, rtol=2e-4, atol=2e-4), (loss2, ref2)

    # --- Test 3: forced small tiles -> 2x3 grid, multi-slab inner loop,
    #             partial last tile AND a fully clamped/masked overhang tile ----
    N3, C3 = 200, 160
    x3 = jax.nn.log_softmax(jax.random.normal(k5, (N3, C3), dtype=jnp.float32), axis=1)
    t3 = jax.nn.softmax(jax.random.normal(k6, (N3, C3), dtype=jnp.float32), axis=1)
    loss3 = jax.block_until_ready(
        weighted_combination_loss(x3, t3, lmd=0.8, tile_rows=48, slab_rows=16))
    ref3 = _reference(x3, t3, lmd=0.8)
    assert jnp.allclose(loss3, ref3, rtol=1e-5, atol=1e-5), (loss3, ref3)

    # --- Test 4: bf16, default tiling -> 2 super-blocks, masked partial tile ---
    N4, C4 = 2000, 160
    x4 = jax.nn.log_softmax(
        jax.random.normal(k7, (N4, C4), dtype=jnp.float32), axis=1).astype(jnp.bfloat16)
    t4 = jax.nn.softmax(
        jax.random.normal(k8, (N4, C4), dtype=jnp.float32), axis=1).astype(jnp.bfloat16)
    loss4 = jax.block_until_ready(weighted_combination_loss(x4, t4, lmd=0.8))
    ref4 = _reference(x4, t4, lmd=0.8)
    assert jnp.allclose(loss4, ref4, rtol=2e-4, atol=2e-4), (loss4, ref4)

    print("KERNEL_OK")
</pallas_src>

<mosaic_0001>
module attributes {stable_mosaic.version = 11 : i64} {
  func.func @loss_kernel(%arg0: i32, %arg1: i32, %arg2: memref<8x32xf32, #tpu.memory_space<vmem>>, %arg3: memref<8x32xf32, #tpu.memory_space<vmem>>, %arg4: memref<1x1xf32, #tpu.memory_space<vmem>>, %arg5: memref<8x1xf32, #tpu.memory_space<vmem>>, %arg6: memref<8x1xf32, #tpu.memory_space<vmem>>) attributes {dimension_semantics = [#tpu.dimension_semantics<parallel>, #tpu.dimension_semantics<arbitrary>], iteration_bounds = array<i64: 1, 1>, scalar_prefetch = 0 : i64, scratch_operands = 2 : i64, tpu.core_type = #tpu.core_type<tc>, window_params = [{transform_indices = @transform_0, window_bounds = array<i64: 8, 32>}, {transform_indices = @transform_1, window_bounds = array<i64: 8, 32>}, {transform_indices = @transform_2, window_bounds = array<i64: 1, 1>}]} {
    %c0_i32 = arith.constant 0 : i32
    %0 = arith.cmpi eq, %arg1, %c0_i32 : i32
    %1 = arith.extui %0 : i1 to i32
    %c0_i32_0 = arith.constant 0 : i32
    %2 = arith.cmpi ne, %1, %c0_i32_0 : i32
    scf.if %2 {
      %cst_23 = arith.constant 0.000000e+00 : f32
      %56 = vector.broadcast %cst_23 : f32 to vector<8x1xf32>
      %c0_24 = arith.constant 0 : index
      %c0_25 = arith.constant 0 : index
      %57 = vector.load %arg5[%c0_24, %c0_25] : memref<8x1xf32, #tpu.memory_space<vmem>>, vector<8x1xf32>
      tpu.vector_store %arg5[%c0_24, %c0_25], %56 {strides = array<i32>} : memref<8x1xf32, #tpu.memory_space<vmem>>, vector<8x1xf32>,
      %cst_26 = arith.constant 0.000000e+00 : f32
      %58 = vector.broadcast %cst_26 : f32 to vector<8x1xf32>
      %c0_27 = arith.constant 0 : index
      %c0_28 = arith.constant 0 : index
      %59 = vector.load %arg6[%c0_27, %c0_28] : memref<8x1xf32, #tpu.memory_space<vmem>>, vector<8x1xf32>
      tpu.vector_store %arg6[%c0_27, %c0_28], %58 {strides = array<i32>} : memref<8x1xf32, #tpu.memory_space<vmem>>, vector<8x1xf32>,
    } else {
    }
    %c0_i32_1 = arith.constant 0 : i32
    %c8_i32 = arith.constant 8 : i32
    %3 = arith.muli %c0_i32_1, %c8_i32 : i32
    %4 = arith.index_cast %3 : i32 to index
    %c0 = arith.constant 0 : index
    %5 = vector.load %arg2[%4, %c0] : memref<8x32xf32, #tpu.memory_space<vmem>>, vector<8x32xf32>
    %6 = arith.index_cast %3 : i32 to index
    %c0_2 = arith.constant 0 : index
    %7 = vector.load %arg3[%6, %c0_2] : memref<8x32xf32, #tpu.memory_space<vmem>>, vector<8x32xf32>
    %cst = arith.constant 0.000000e+00 : f32
    %8 = vector.broadcast %cst : f32 to vector<8x32xf32>
    %9 = arith.cmpf ogt, %7, %8 : vector<8x32xf32>
    %cst_3 = arith.constant 1.000000e+00 : f32
    %10 = vector.broadcast %cst_3 : f32 to vector<8x32xf32>
    %11 = arith.select %9, %7, %10 : vector<8x32xi1>, vector<8x32xf32>
    %cst_4 = arith.constant 0.000000e+00 : f32
    %12 = vector.broadcast %cst_4 : f32 to vector<8x32xf32>
    %13 = arith.cmpf ogt, %7, %12 : vector<8x32xf32>
    %14 = math.log %11 : vector<8x32xf32>
    %15 = arith.mulf %7, %14 : vector<8x32xf32>
    %cst_5 = arith.constant 0.000000e+00 : f32
    %16 = vector.broadcast %cst_5 : f32 to vector<8x32xf32>
    %17 = arith.select %13, %15, %16 : vector<8x32xi1>, vector<8x32xf32>
    %18 = arith.mulf %7, %5 : vector<8x32xf32>
    %19 = arith.subf %17, %18 : vector<8x32xf32>
    %cst_6 = arith.constant dense<0.000000e+00> : vector<8xf32>
    %20 = vector.multi_reduction <add>, %19, %cst_6 [1] : vector<8x32xf32> to vector<8xf32>
    %21 = vector.shape_cast %20 : vector<8xf32> to vector<8x1xf32>
    %cst_7 = arith.constant dense<0xFF800000> : vector<8xf32>
    %22 = vector.multi_reduction <maximumf>, %5, %cst_7 [1] : vector<8x32xf32> to vector<8xf32>
    %23 = vector.shape_cast %22 : vector<8xf32> to vector<8x1xf32>
    %24 = vector.broadcast %23 : vector<8x1xf32> to vector<8x32xf32>
    %25 = arith.subf %5, %24 : vector<8x32xf32>
    %26 = math.exp %25 : vector<8x32xf32>
    %cst_8 = arith.constant dense<0.000000e+00> : vector<8xf32>
    %27 = vector.multi_reduction <add>, %26, %cst_8 [1] : vector<8x32xf32> to vector<8xf32>
    %28 = vector.shape_cast %27 : vector<8xf32> to vector<8x1xf32>
    %29 = math.log %28 : vector<8x1xf32>
    %30 = arith.addf %23, %29 : vector<8x1xf32>
    %31 = tpu.iota {dimensions = array<i32: 1>} : vector<8x32xi32>
    %cst_9 = arith.constant dense<0xFF800000> : vector<8xf32>
    %32 = vector.multi_reduction <maximumf>, %7, %cst_9 [1] : vector<8x32xf32> to vector<8xf32>
    %33 = vector.shape_cast %32 : vector<8xf32> to vector<8x1xf32>
    %34 = vector.broadcast %33 : vector<8x1xf32> to vector<8x32xf32>
    %35 = arith.cmpf oeq, %7, %34 : vector<8x32xf32>
    %c32_i32 = arith.constant 32 : i32
    %36 = vector.broadcast %c32_i32 : i32 to vector<8x32xi32>
    %37 = arith.select %35, %31, %36 : vector<8x32xi1>, vector<8x32xi32>
    %cst_10 = arith.constant dense<2147483647> : vector<8xi32>
    %38 = vector.multi_reduction <minsi>, %37, %cst_10 [1] : vector<8x32xi32> to vector<8xi32>
    %39 = vector.shape_cast %38 : vector<8xi32> to vector<8x1xi32>
    %40 = vector.broadcast %39 : vector<8x1xi32> to vector<8x32xi32>
    %41 = arith.cmpi eq, %31, %40 : vector<8x32xi32>
    %cst_11 = arith.constant 0.000000e+00 : f32
    %42 = vector.broadcast %cst_11 : f32 to vector<8x32xf32>
    %43 = arith.select %41, %5, %42 : vector<8x32xi1>, vector<8x32xf32>
    %cst_12 = arith.constant dense<0.000000e+00> : vector<8xf32>
    %44 = vector.multi_reduction <add>, %43, %cst_12 [1] : vector<8x32xf32> to vector<8xf32>
    %45 = vector.shape_cast %44 : vector<8xf32> to vector<8x1xf32>
    %46 = arith.subf %30, %45 : vector<8x1xf32>
    %c0_13 = arith.constant 0 : index
    %c0_14 = arith.constant 0 : index
    %47 = vector.load %arg5[%c0_13, %c0_14] : memref<8x1xf32, #tpu.memory_space<vmem>>, vector<8x1xf32>
    %48 = arith.addf %47, %21 : vector<8x1xf32>
    %c0_15 = arith.constant 0 : index
    %c0_16 = arith.constant 0 : index
    %49 = vector.load %arg5[%c0_15, %c0_16] : memref<8x1xf32, #tpu.memory_space<vmem>>, vector<8x1xf32>
    tpu.vector_store %arg5[%c0_15, %c0_16], %48 {strides = array<i32>} : memref<8x1xf32, #tpu.memory_space<vmem>>, vector<8x1xf32>,
    %c0_17 = arith.constant 0 : index
    %c0_18 = arith.constant 0 : index
    %50 = vector.load %arg6[%c0_17, %c0_18] : memref<8x1xf32, #tpu.memory_space<vmem>>, vector<8x1xf32>
    %51 = arith.addf %50, %46 : vector<8x1xf32>
    %c0_19 = arith.constant 0 : index
    %c0_20 = arith.constant 0 : index
    %52 = vector.load %arg6[%c0_19, %c0_20] : memref<8x1xf32, #tpu.memory_space<vmem>>, vector<8x1xf32>
    tpu.vector_store %arg6[%c0_19, %c0_20], %51 {strides = array<i32>} : memref<8x1xf32, #tpu.memory_space<vmem>>, vector<8x1xf32>,
    %c1_i32 = arith.constant 1 : i32
    %c0_i32_21 = arith.constant 0 : i32
    %53 = arith.cmpi eq, %arg1, %c0_i32_21 : i32
    %54 = arith.extui %53 : i1 to i32
    %c0_i32_22 = arith.constant 0 : i32
    %55 = arith.cmpi ne, %54, %c0_i32_22 : i32
    scf.if %55 {
      %c0_23 = arith.constant 0 : index
      %c0_24 = arith.constant 0 : index
      %56 = vector.load %arg5[%c0_23, %c0_24] : memref<8x1xf32, #tpu.memory_space<vmem>>, vector<8x1xf32>
      %cst_25 = arith.constant dense<0.000000e+00> : vector<1xf32>
      %57 = vector.multi_reduction <add>, %56, %cst_25 [0] : vector<8x1xf32> to vector<1xf32>
      %58 = vector.shape_cast %57 : vector<1xf32> to vector<1x1xf32>
      %c0_26 = arith.constant 0 : index
      %c0_27 = arith.constant 0 : index
      %59 = vector.load %arg6[%c0_26, %c0_27] : memref<8x1xf32, #tpu.memory_space<vmem>>, vector<8x1xf32>
      %cst_28 = arith.constant dense<0.000000e+00> : vector<1xf32>
      %60 = vector.multi_reduction <add>, %59, %cst_28 [0] : vector<8x1xf32> to vector<1xf32>
      %61 = vector.shape_cast %60 : vector<1xf32> to vector<1x1xf32>
      %cst_29 = arith.constant 8.000000e-01 : f32
      %62 = vector.broadcast %cst_29 : f32 to vector<1x1xf32>
      %63 = arith.mulf %62, %58 : vector<1x1xf32>
      %cst_30 = arith.constant 2.000000e-01 : f32
      %64 = vector.broadcast %cst_30 : f32 to vector<1x1xf32>
      %65 = arith.mulf %64, %61 : vector<1x1xf32>
      %66 = arith.addf %63, %65 : vector<1x1xf32>
      %cst_31 = arith.constant 1.250000e-01 : f32
      %67 = vector.broadcast %cst_31 : f32 to vector<1x1xf32>
      %68 = arith.mulf %66, %67 : vector<1x1xf32>
      %c0_32 = arith.constant 0 : index
      %c0_33 = arith.constant 0 : index
      %69 = vector.load %arg4[%c0_32, %c0_33] : memref<1x1xf32, #tpu.memory_space<vmem>>, vector<1x1xf32>
      tpu.vector_store %arg4[%c0_32, %c0_33], %68 {strides = array<i32>} : memref<1x1xf32, #tpu.memory_space<vmem>>, vector<1x1xf32>,
    } else {
    }
    return
  }
  func.func @transform_0(%arg0: i32, %arg1: i32) -> (i32, i32) {
    %c1_i32 = arith.constant 1 : i32
    %0 = arith.muli %arg0, %c1_i32 : i32
    %1 = arith.addi %0, %arg1 : i32
    %c0_i32 = arith.constant 0 : i32
    %2 = arith.minsi %1, %c0_i32 : i32
    %c0_i32_0 = arith.constant 0 : i32
    %c0_i32_1 = arith.constant 0 : i32
    return %2, %c0_i32_0 : i32, i32
  }
  func.func @transform_1(%arg0: i32, %arg1: i32) -> (i32, i32) {
    %c1_i32 = arith.constant 1 : i32
    %0 = arith.muli %arg0, %c1_i32 : i32
    %1 = arith.addi %0, %arg1 : i32
    %c0_i32 = arith.constant 0 : i32
    %2 = arith.minsi %1, %c0_i32 : i32
    %c0_i32_0 = arith.constant 0 : i32
    %c0_i32_1 = arith.constant 0 : i32
    return %2, %c0_i32_0 : i32, i32
  }
  func.func @transform_2(%arg0: i32, %arg1: i32) -> (i32, i32) {
    %c0_i32 = arith.constant 0 : i32
    %c0_i32_0 = arith.constant 0 : i32
    return %arg0, %c0_i32 : i32, i32
  }
}

</mosaic_0001>

<llo_original>
// kernel: weighted_combination_loss.1
$region0: #{weighted_combination_loss.1}
  #allocation0 [shape = 'u32[]', space=smem, size = 0x4, offset = 0x4, fixed_abs, tag = 'smem constant byte address 0x4 - core index']
  #allocation1 [shape = 'u32[144,128]{1,0:T(1,128)}', space=vmem, size = 0x12000, scoped, tag = 'internal scratch']
  #allocation2 [shape = 'f32[8,1]{1,0:T(8,128)}', space=vmem, size = 0x1000, scoped, tag = 'scratch operand']
  #allocation3 [shape = 'f32[8,1]{1,0:T(8,128)}', space=vmem, size = 0x1000, scoped, tag = 'scratch operand']
  %s0 = inlined_call_operand.hbm [shape: f32[8,32], index: 0, kind: input, shape index: {}]
  %s1 = inlined_call_operand.hbm [shape: f32[8,32], index: 1, kind: input, shape index: {}]
  %s2 = inlined_call_operand.hbm [shape: f32[1,1], index: 2, kind: output, shape index: {}]
  %s3 = sld [smem:[#allocation0]]
  $region34: #{weighted_combination_loss.1} parent=0
    _
  %s5 = ssub.s32 1, %s3
  %s6 = scalar_select 0, %s5, %s3
  $region1: #{weighted_combination_loss.1} parent=0
    #allocation4 [shape = 'u8[4096]{0}', space=vmem, size = 0x1000, scoped, tag = 'input window, operand 0, single buffered']
    #allocation5 [shape = 's32[1]{0}', space=sflag, size = 0x4, scoped, tag = 'scoped memory for weighted_combination_loss.1']
    #allocation6 [shape = 's32[1]{0}', space=sflag, size = 0x4, scoped, tag = 'scoped memory for weighted_combination_loss.1']
    #allocation7 [shape = 'u8[4096]{0}', space=vmem, size = 0x1000, scoped, tag = 'input window, operand 1, single buffered']
    #allocation8 [shape = 's32[1]{0}', space=sflag, size = 0x4, scoped, tag = 'scoped memory for weighted_combination_loss.1']
    #allocation9 [shape = 'u8[512]{0}', space=vmem, size = 0x400, scoped, tag = 'output window, operand 0, single buffered']
    %7 = vsyncpa [#allocation5], 0
    %8 = vsyncpa [#allocation8], 0
    %9 = vsyncpa [#allocation6], 0
    // Predicated region
    $region2: #{weighted_combination_loss.1} parent=1 // pred_check
      _
    $region3: #{weighted_combination_loss.1} parent=1 // pred_check_branch
      %11 = sbr.rel (0) target = $region5
    $region4: #{weighted_combination_loss.1} parent=1 // pred_region
      %s12 = sadd.s32 0, 0
      %p13 = scmp.lt.s32.totalorder %s12, 0
      %s14 = scalar_select %p13, %s12, 0
      %s16 = ssub.s32 128, 128
      %17 = vsyncadd [#allocation5], %s16
      %s18 = smul.addr %s14, 128
      %s19 = scalar_lea.hbm %s0, %s18
      %s21 = sshll.u32 [#allocation4], 4
      %s22 = int_to_ptr.vmem [resolvable:$true] %s21
      %24 = dma.hbm_to_vmem [thread:$0]  %s19, 128, %s22, [#allocation5]
    $region5: #{weighted_combination_loss.1} parent=1 // pred_fallthru
      _
    // Predicated region
    $region6: #{weighted_combination_loss.1} parent=1 // pred_check
      _
    $region7: #{weighted_combination_loss.1} parent=1 // pred_check_branch
      %26 = sbr.rel (0) target = $region9
    $region8: #{weighted_combination_loss.1} parent=1 // pred_region
      %s27 = sadd.s32 0, 0
      %p28 = scmp.lt.s32.totalorder %s27, 0
      %s29 = scalar_select %p28, %s27, 0
      %s31 = ssub.s32 128, 128
      %32 = vsyncadd [#allocation8], %s31
      %s33 = smul.addr %s29, 128
      %s34 = scalar_lea.hbm %s1, %s33
      %s36 = sshll.u32 [#allocation7], 4
      %s37 = int_to_ptr.vmem [resolvable:$true] %s36
      %39 = dma.hbm_to_vmem [thread:$0]  %s34, 128, %s37, [#allocation8]
    $region9: #{weighted_combination_loss.1} parent=1 // pred_fallthru
      _
    // Predicated region
    $region10: #{weighted_combination_loss.1} parent=1 // pred_check
      _
    $region11: #{weighted_combination_loss.1} parent=1 // pred_check_branch
      %41 = sbr.rel (0) target = $region13
    $region12: #{weighted_combination_loss.1} parent=1 // pred_region
      %42 = dma.done [#allocation5], 128
    $region13: #{weighted_combination_loss.1} parent=1 // pred_fallthru
      _
    // Predicated region
    $region14: #{weighted_combination_loss.1} parent=1 // pred_check
      _
    $region15: #{weighted_combination_loss.1} parent=1 // pred_check_branch
      %44 = sbr.rel (0) target = $region17
    $region16: #{weighted_combination_loss.1} parent=1 // pred_region
      %45 = dma.done [#allocation8], 128
    $region17: #{weighted_combination_loss.1} parent=1 // pred_fallthru
      _
    %s46 = sadd.s32 0, 0
    %p47 = scmp.lt.s32.totalorder %s46, 0
    %s48 = scalar_select %p47, %s46, 0
    %s49 = sadd.s32 0, 0
    %p50 = scmp.lt.s32.totalorder %s49, 0
    %s51 = scalar_select %p50, %s49, 0
    %p52 = scmp.eq.s32.totalorder 0, 0
    // Predicated region
    $region18: #{weighted_combination_loss.1} parent=1 // pred_check
      %p53 = pneg %p52
    $region19: #{weighted_combination_loss.1} parent=1 // pred_check_branch
      %55 = sbr.rel (%p53) target = $region21
    $region20: #{weighted_combination_loss.1} parent=1 // pred_region
      %vm56 = vcmask 7168
      %57 = vst.msk [vmem:[#allocation2] sm:$0xff] %vm56, 0.0
      %58 = vst.msk [vmem:[#allocation3] sm:$0xff] %vm56, 0.0
    $region21: #{weighted_combination_loss.1} parent=1 // pred_fallthru
      _
    %v59 = vld [vmem:[#allocation4] sm:$0xff]
    %v60 = vld [vmem:[#allocation7] sm:$0xff]
    %vm61 = vcmp.gt.f32.partialorder %v60, 0.0
    %v62 = vsel %vm61, %v60, 1.0
    %v63 = vlog2.pop %v62
    %v64 = vmul.f32 %v63, 0.6931472
    %v65 = vmul.f32 %v60, %v64
    %v66 = vsel %vm61, %v65, 0.0
    %v67 = vmul.f32 %v60, %v59
    %v68 = vsub.f32 %v66, %v67
    %vm69 = vcmask 261120
    %v70 = vsel %vm69, %v68, 0.0
    %71 = vadd.xlane.f32.xlu0 %v70
    %v72 = vpop.xlane.xlu0 %71
    %v73 = vsel %vm69, %v59, -inf
    %74 = vmax.xlane.f32.xlu0 %v73
    %v75 = vpop.xlane.xlu0 %74
    %v76 = vsub.f32 %v59, %v75
    %v77 = vmul.f32 %v76, 1.442695
    %v78 = vpow.pop %v77
    %v79 = vsel %vm69, %v78, 0.0
    %80 = vadd.xlane.f32.xlu0 %v79
    %v81 = vpop.xlane.xlu0 %80
    %v82 = vlog2.pop %v81
    %v83 = vmul.f32 %v82, 0.6931472
    %v84 = vadd.f32 %v75, %v83
    %v85 = vlaneseq
    %v86 = vand.u32 %v85, 127
    %v87 = vsel %vm69, %v60, -inf
    %88 = vmax.xlane.f32.xlu0 %v87
    %v89 = vpop.xlane.xlu0 %88
    %vm90 = vcmp.eq.f32.partialorder %v60, %v89
    %v91 = vsel %vm90, %v86, 32
    %v92 = vsel %vm69, %v91, 2147483647
    %v93 = vand.u32 %v92, 65535
    %v94 = vshra.s32 %v92, 16
    %v95 = vcvt.s32.f32 %v93
    %v96 = vcvt.s32.f32 %v94
    %97 = vmin.xlane.f32.xlu0 %v96
    %v98 = vpop.xlane.xlu0 %97
    %vm99 = vcmp.eq.f32.partialorder %v96, %v98
    %v100 = vsel %vm99, %v95, inf
    %101 = vmin.xlane.f32.xlu0 %v100
    %v102 = vpop.xlane.xlu0 %101
    %v103 = vcvt.f32.s32 %v102
    %v104 = vcvt.f32.s32 %v98
    %v105 = vshll.u32 %v104, 16
    %v106 = vadd.s32 %v105, %v103
    %vm107 = vcmp.eq.s32.totalorder %v86, %v106
    %v108 = vsel %vm107, %v59, 0.0
    %v109 = vsel %vm69, %v108, 0.0
    %110 = vadd.xlane.f32.xlu0 %v109
    %v111 = vpop.xlane.xlu0 %110
    %v112 = vsub.f32 %v84, %v111
    %v113 = vld [vmem:[#allocation2] sm:$0xff]
    %v114 = vadd.f32 %v113, %v72
    %vm115 = vcmask 7168
    %116 = vst.msk [vmem:[#allocation2] sm:$0xff] %vm115, %v114
    %v117 = vld [vmem:[#allocation3] sm:$0xff]
    %v118 = vadd.f32 %v117, %v112
    %119 = vst.msk [vmem:[#allocation3] sm:$0xff] %vm115, %v118
    // Predicated region
    $region22: #{weighted_combination_loss.1} parent=1 // pred_check
      %p120 = pneg %p52
    $region23: #{weighted_combination_loss.1} parent=1 // pred_check_branch
      %122 = sbr.rel (%p120) target = $region25
    $region24: #{weighted_combination_loss.1} parent=1 // pred_region
      %v123 = vld [vmem:[#allocation2] sm:$0xff]
      %v124 = vsel %vm115, %v123, 0.0
      %v125 = vrot.slane %v124, 4
      %v126 = vadd.f32 %v124, %v125
      %v127 = vrot.slane %v126, 2
      %v128 = vadd.f32 %v126, %v127
      %v129 = vrot.slane %v128, 1
      %v130 = vadd.f32 %v128, %v129
      %v131 = vld [vmem:[#allocation3] sm:$0xff]
      %v132 = vsel %vm115, %v131, 0.0
      %v133 = vrot.slane %v132, 4
      %v134 = vadd.f32 %v132, %v133
      %v135 = vrot.slane %v134, 2
      %v136 = vadd.f32 %v134, %v135
      %v137 = vrot.slane %v136, 1
      %v138 = vadd.f32 %v136, %v137
      %v139 = vmul.f32 %v130, 0.8
      %v140 = vmul.f32 %v138, 0.2
      %v141 = vadd.f32 %v139, %v140
      %v142 = vmul.f32 %v141, 0.125
      %vm143 = vcmask 0
      %144 = vst.msk [vmem:[#allocation9] sm:$0x1] %vm143, %v142
    $region25: #{weighted_combination_loss.1} parent=1 // pred_fallthru
      _
    // Predicated region
    $region26: #{weighted_combination_loss.1} parent=1 // pred_check
      _
    $region27: #{weighted_combination_loss.1} parent=1 // pred_check_branch
      %146 = sbr.rel (0) target = $region29
    $region28: #{weighted_combination_loss.1} parent=1 // pred_region
      %s148 = ssub.s32 16, 16
      %149 = vsyncadd [#allocation6], %s148
      %s151 = sshll.u32 [#allocation9], 4
      %s152 = int_to_ptr.vmem [resolvable:$true] %s151
      %154 = dma.vmem_to_hbm [thread:$0]  %s152, 16, %s2, [#allocation6]
    $region29: #{weighted_combination_loss.1} parent=1 // pred_fallthru
      _
    // Predicated region
    $region30: #{weighted_combination_loss.1} parent=1 // pred_check
      _
    $region31: #{weighted_combination_loss.1} parent=1 // pred_check_branch
      %156 = sbr.rel (0) target = $region33
    $region32: #{weighted_combination_loss.1} parent=1 // pred_region
      %157 = dma.done [#allocation6], 16
    $region33: #{weighted_combination_loss.1} parent=1 // pred_fallthru
      _
    %158 = vsyncpa [#allocation5], 1
    %159 = vsyncpa [#allocation8], 1
    %160 = vsyncpa [#allocation6], 1

</llo_original>
